<compile_context>
chip_gen: v6e
topology: v6e:2x2x1
jax: 0.10.0
libtpu: 0.0.40
codegen_flags: <defaults>
</compile_context>

<pallas_src>
import functools

import jax
import jax.numpy as jnp
from jax import lax
from jax.experimental import pallas as pl
from jax.experimental.pallas import tpu as pltpu

LANE = 128  # TPU lane width; hidden feature dims are zero-padded to this.


def anet_kernel(x_ref, w1_ref, b1_ref, w2_ref, b2_ref, w3_ref, b3_ref, o_ref):
    cdt = w1_ref.dtype
    # Cast activations to the weight/compute dtype on the VPU (no-op for f32).
    x = x_ref[...].astype(cdt)

    # fc1 + relu   (MXU matmul, f32 accumulation; bias-add/relu in f32)
    h1 = jnp.dot(x, w1_ref[...], preferred_element_type=jnp.float32)
    h1 = jnp.maximum(h1 + b1_ref[...], 0.0)

    # fc2 + relu
    h2 = jnp.dot(h1.astype(cdt), w2_ref[...], preferred_element_type=jnp.float32)
    h2 = jnp.maximum(h2 + b2_ref[...], 0.0)

    # Output layer computed lane-major:  w3t (8,128) . h2^T (128,tb) -> (8,tb);
    # only row 0 is real (rows 1..7 of w3t are zero padding).
    ot = lax.dot_general(
        w3_ref[...], h2.astype(cdt),
        dimension_numbers=(((1,), (1,)), ((), ())),
        preferred_element_type=jnp.float32,
    )
    # 10*tanh only on the packed real row; unmasked lane-dense (1, tb) store.
    o_ref[...] = 10.0 * jnp.tanh(ot[0:1, :] + b3_ref[0, 0])


def init_anet_params(key, s_dim):
    """Init matching ANet.__init__: weights ~ N(0, sigma), biases ~ U(+-1/sqrt(fan_in)).

    Weights are stored (in_features, out_features) so the forward computes x @ W + b.
    Returns the *logical* (unpadded) f32 params.
    """
    k = jax.random.split(key, 6)
    dims = [(s_dim, 50, 0.01), (50, 20, 0.1), (20, 1, 0.01)]
    params = []
    for i, (fan_in, fan_out, sigma) in enumerate(dims):
        w = sigma * jax.random.normal(k[2 * i], (fan_in, fan_out), dtype=jnp.float32)
        bound = 1.0 / (fan_in ** 0.5)
        b = jax.random.uniform(
            k[2 * i + 1], (1, fan_out), dtype=jnp.float32, minval=-bound, maxval=bound
        )
        params += [w, b]
    return tuple(params)


def pad_params_for_kernel(params, compute_dtype=jnp.float32):
    """Zero-pad feature dims to the 128-lane width (lane-dense kernel layout).

    Padded weight columns/rows and padded bias entries are 0, so padded hidden
    units are exactly 0 after ReLU and contribute nothing downstream.
    The third-layer weights are stored transposed (row 0 = the single output
    column) so the kernel can produce a lane-major (1, tb) result directly.
    Weights are cast to `compute_dtype`; biases stay f32.
    """
    w1, b1, w2, b2, w3, b3 = params
    s_dim = w1.shape[0]

    def pad_to(a, shape):
        out = jnp.zeros(shape, dtype=jnp.float32)
        return out.at[: a.shape[0], : a.shape[1]].set(a)

    w1p = pad_to(w1, (s_dim, LANE)).astype(compute_dtype)
    w2p = pad_to(w2, (LANE, LANE)).astype(compute_dtype)
    w3t = pad_to(w3.T, (8, LANE)).astype(compute_dtype)   # row 0 holds w3[:, 0]
    b1p = pad_to(b1, (1, LANE))
    b2p = pad_to(b2, (1, LANE))
    b3s = b3.reshape(1, 1).astype(jnp.float32)            # scalar, lives in SMEM
    return (w1p, b1p, w2p, b2p, w3t, b3s)


def _round_up(n, m):
    return ((n + m - 1) // m) * m


@functools.partial(jax.jit, static_argnames=("tile_b",))
def anet_forward(x, padded_params, *, tile_b=4096):
    """x: (B, s_dim) -> actions (B, 1).  `padded_params` from pad_params_for_kernel."""
    w1p, b1p, w2p, b2p, w3t, b3s = padded_params
    B, s_dim = x.shape

    # Batch tile: large (amortize ~0.35us/step), multiple of 8, capped near
    # ceil(B/2) so >=2 tiles feed both TensorCores on v7x.  For tiny B use the
    # exact batch so the single block matches the full array (no ragged edge).
    tb = min(int(tile_b), max(8, _round_up(pl.cdiv(B, 2), 8)))
    n_tiles = pl.cdiv(B, tb)
    if n_tiles == 1:
        tb = B

    param_bytes = sum(int(p.size) * p.dtype.itemsize for p in padded_params)
    cost = pl.CostEstimate(
        flops=2 * B * (s_dim * 50 + 50 * 20 + 20 * 1),
        transcendentals=B,
        bytes_accessed=int(x.size) * x.dtype.itemsize + B * 4 + param_bytes,
    )

    out_packed = pl.pallas_call(
        anet_kernel,
        out_shape=jax.ShapeDtypeStruct((n_tiles, 1, tb), jnp.float32),
        grid=(n_tiles,),
        in_specs=[
            # activation stream: tiled over the batch, double-buffer pipelined
            pl.BlockSpec((tb, s_dim), lambda i: (i, 0)),
            # weights / biases: constant index -> stay VMEM-resident
            pl.BlockSpec((s_dim, LANE), lambda i: (0, 0)),
            pl.BlockSpec((1, LANE), lambda i: (0, 0)),
            pl.BlockSpec((LANE, LANE), lambda i: (0, 0)),
            pl.BlockSpec((1, LANE), lambda i: (0, 0)),
            pl.BlockSpec((8, LANE), lambda i: (0, 0)),
            # b3 scalar in SMEM
            pl.BlockSpec(memory_space=pltpu.MemorySpace.SMEM),
        ],
        # lane-dense packed output: one (1, tb) row per batch tile
        out_specs=pl.BlockSpec((None, 1, tb), lambda i: (i, 0, 0)),
        compiler_params=pltpu.CompilerParams(
            dimension_semantics=("parallel",),  # shard batch tiles across TCs (v7x)
        ),
        cost_estimate=cost,
    )(x, w1p, b1p, w2p, b2p, w3t, b3s)

    # Entry (i, 0, j) is the action for batch row i*tb + j; flatten and slice
    # off any garbage columns coming from the ragged last tile.
    return out_packed.reshape(-1)[:B].reshape(B, 1)


if __name__ == "__main__":
    s_dim = 8
    batch = 2

    key = jax.random.PRNGKey(0)
    k_x, k_p = jax.random.split(key)
    x = jax.random.normal(k_x, (batch, s_dim), dtype=jnp.float32)

    params = init_anet_params(k_p, s_dim)
    # f32 params for exact parity in this demo; pass compute_dtype=jnp.bfloat16
    # (and feed bf16 x) on v6e/v7x to halve HBM read traffic for large batches.
    padded_params = pad_params_for_kernel(params, compute_dtype=jnp.float32)

    actions = anet_forward(x, padded_params)
    jax.block_until_ready(actions)

    # Pure-JAX reference check (unpadded params).
    w1, b1, w2, b2, w3, b3 = params

    def ref_fwd(xx):
        h1 = jnp.maximum(xx @ w1 + b1, 0.0)
        h2 = jnp.maximum(h1 @ w2 + b2, 0.0)
        return 10.0 * jnp.tanh(h2 @ w3 + b3)

    ref = ref_fwd(x)
    assert actions.shape == (batch, 1)
    assert jnp.allclose(actions, ref, atol=1e-5, rtol=1e-5)

    # Multi-tile, non-multiple batch: exercises the gridded + ragged-block path.
    x_big = jax.random.normal(jax.random.PRNGKey(1), (1037, s_dim), dtype=jnp.float32)
    act_big = anet_forward(x_big, padded_params)
    jax.block_until_ready(act_big)
    ref_big = ref_fwd(x_big)
    assert act_big.shape == (1037, 1)
    assert jnp.allclose(act_big, ref_big, atol=1e-5, rtol=1e-5)

    print("KERNEL_OK")
</pallas_src>

<mosaic_0001>
module attributes {stable_mosaic.version = 11 : i64} {
  func.func @anet_kernel(%arg0: i32, %arg1: memref<2x8xf32, #tpu.memory_space<vmem>>, %arg2: memref<8x128xf32, #tpu.memory_space<vmem>>, %arg3: memref<1x128xf32, #tpu.memory_space<vmem>>, %arg4: memref<128x128xf32, #tpu.memory_space<vmem>>, %arg5: memref<1x128xf32, #tpu.memory_space<vmem>>, %arg6: memref<8x128xf32, #tpu.memory_space<vmem>>, %arg7: memref<1x1xf32, #tpu.memory_space<smem>>, %arg8: memref<1x1x2xf32, #tpu.memory_space<vmem>>) attributes {dimension_semantics = [#tpu.dimension_semantics<parallel>], iteration_bounds = array<i64: 1>, scalar_prefetch = 0 : i64, scratch_operands = 0 : i64, tpu.core_type = #tpu.core_type<tc>, window_params = [{transform_indices = @transform_0, window_bounds = array<i64: 2, 8>}, {pipeline_mode = #tpu.pipeline_mode<synchronous>, transform_indices = @transform_1, window_bounds = array<i64: 8, 128>}, {pipeline_mode = #tpu.pipeline_mode<synchronous>, transform_indices = @transform_2, window_bounds = array<i64: 1, 128>}, {pipeline_mode = #tpu.pipeline_mode<synchronous>, transform_indices = @transform_3, window_bounds = array<i64: 128, 128>}, {pipeline_mode = #tpu.pipeline_mode<synchronous>, transform_indices = @transform_4, window_bounds = array<i64: 1, 128>}, {pipeline_mode = #tpu.pipeline_mode<synchronous>, transform_indices = @transform_5, window_bounds = array<i64: 8, 128>}, {transform_indices = @transform_6, window_bounds = array<i64: 1, 1>}, {transform_indices = @transform_7, window_bounds = array<i64: 1, 1, 2>}]} {
    %c0 = arith.constant 0 : index
    %c0_0 = arith.constant 0 : index
    %0 = vector.load %arg1[%c0, %c0_0] : memref<2x8xf32, #tpu.memory_space<vmem>>, vector<2x8xf32>
    %c0_1 = arith.constant 0 : index
    %c0_2 = arith.constant 0 : index
    %1 = vector.load %arg2[%c0_1, %c0_2] : memref<8x128xf32, #tpu.memory_space<vmem>>, vector<8x128xf32>
    %cst = arith.constant dense<0.000000e+00> : vector<2x128xf32>
    %2 = tpu.matmul %0, %1, %cst {dimension_numbers = #tpu.dot_dimension_numbers<[1], [0], [0], [1], [0, 0, 1, 1], [], []>} : vector<2x8xf32>, vector<8x128xf32>, vector<2x128xf32> -> vector<2x128xf32>
    %c0_3 = arith.constant 0 : index
    %c0_4 = arith.constant 0 : index
    %3 = vector.load %arg3[%c0_3, %c0_4] : memref<1x128xf32, #tpu.memory_space<vmem>>, vector<1x128xf32>
    %4 = vector.broadcast %3 : vector<1x128xf32> to vector<2x128xf32>
    %5 = arith.addf %2, %4 : vector<2x128xf32>
    %cst_5 = arith.constant 0.000000e+00 : f32
    %6 = vector.broadcast %cst_5 : f32 to vector<2x128xf32>
    %7 = arith.maximumf %5, %6 : vector<2x128xf32>
    %c0_6 = arith.constant 0 : index
    %c0_7 = arith.constant 0 : index
    %8 = vector.load %arg4[%c0_6, %c0_7] : memref<128x128xf32, #tpu.memory_space<vmem>>, vector<128x128xf32>
    %cst_8 = arith.constant dense<0.000000e+00> : vector<2x128xf32>
    %9 = tpu.matmul %7, %8, %cst_8 {dimension_numbers = #tpu.dot_dimension_numbers<[1], [0], [0], [1], [0, 0, 1, 1], [], []>} : vector<2x128xf32>, vector<128x128xf32>, vector<2x128xf32> -> vector<2x128xf32>
    %c0_9 = arith.constant 0 : index
    %c0_10 = arith.constant 0 : index
    %10 = vector.load %arg5[%c0_9, %c0_10] : memref<1x128xf32, #tpu.memory_space<vmem>>, vector<1x128xf32>
    %11 = vector.broadcast %10 : vector<1x128xf32> to vector<2x128xf32>
    %12 = arith.addf %9, %11 : vector<2x128xf32>
    %cst_11 = arith.constant 0.000000e+00 : f32
    %13 = vector.broadcast %cst_11 : f32 to vector<2x128xf32>
    %14 = arith.maximumf %12, %13 : vector<2x128xf32>
    %c0_12 = arith.constant 0 : index
    %c0_13 = arith.constant 0 : index
    %15 = vector.load %arg6[%c0_12, %c0_13] : memref<8x128xf32, #tpu.memory_space<vmem>>, vector<8x128xf32>
    %cst_14 = arith.constant dense<0.000000e+00> : vector<8x2xf32>
    %16 = tpu.matmul %15, %14, %cst_14 {dimension_numbers = #tpu.dot_dimension_numbers<[1], [1], [0], [0], [0, 0, 1, 0], [], []>} : vector<8x128xf32>, vector<2x128xf32>, vector<8x2xf32> -> vector<8x2xf32>
    %17 = vector.extract_strided_slice %16 {offsets = [0, 0], sizes = [1, 2], strides = [1, 1]} : vector<8x2xf32> to vector<1x2xf32>
    %c0_15 = arith.constant 0 : index
    %c0_16 = arith.constant 0 : index
    %18 = memref.load %arg7[%c0_15, %c0_16] : memref<1x1xf32, #tpu.memory_space<smem>>
    %19 = vector.broadcast %18 : f32 to vector<1x2xf32>
    %20 = arith.addf %17, %19 : vector<1x2xf32>
    %21 = math.tanh %20 : vector<1x2xf32>
    %cst_17 = arith.constant 1.000000e+01 : f32
    %22 = vector.broadcast %cst_17 : f32 to vector<1x2xf32>
    %23 = arith.mulf %22, %21 : vector<1x2xf32>
    %c0_18 = arith.constant 0 : index
    %c0_19 = arith.constant 0 : index
    %c0_20 = arith.constant 0 : index
    %24 = vector.load %arg8[%c0_18, %c0_19, %c0_20] : memref<1x1x2xf32, #tpu.memory_space<vmem>>, vector<1x1x2xf32>
    %25 = vector.shape_cast %24 : vector<1x1x2xf32> to vector<1x2xf32>
    %26 = vector.shape_cast %23 : vector<1x2xf32> to vector<1x1x2xf32>
    tpu.vector_store %arg8[%c0_18, %c0_19, %c0_20], %26 {strides = array<i32>} : memref<1x1x2xf32, #tpu.memory_space<vmem>>, vector<1x1x2xf32>,
    return
  }
  func.func @transform_0(%arg0: i32) -> (i32, i32) {
    %c0_i32 = arith.constant 0 : i32
    %c0_i32_0 = arith.constant 0 : i32
    return %arg0, %c0_i32 : i32, i32
  }
  func.func @transform_1(%arg0: i32) -> (i32, i32) {
    %c0_i32 = arith.constant 0 : i32
    %c0_i32_0 = arith.constant 0 : i32
    %c0_i32_1 = arith.constant 0 : i32
    return %c0_i32, %c0_i32_0 : i32, i32
  }
  func.func @transform_2(%arg0: i32) -> (i32, i32) {
    %c0_i32 = arith.constant 0 : i32
    %c0_i32_0 = arith.constant 0 : i32
    %c0_i32_1 = arith.constant 0 : i32
    return %c0_i32, %c0_i32_0 : i32, i32
  }
  func.func @transform_3(%arg0: i32) -> (i32, i32) {
    %c0_i32 = arith.constant 0 : i32
    %c0_i32_0 = arith.constant 0 : i32
    %c0_i32_1 = arith.constant 0 : i32
    return %c0_i32, %c0_i32_0 : i32, i32
  }
  func.func @transform_4(%arg0: i32) -> (i32, i32) {
    %c0_i32 = arith.constant 0 : i32
    %c0_i32_0 = arith.constant 0 : i32
    %c0_i32_1 = arith.constant 0 : i32
    return %c0_i32, %c0_i32_0 : i32, i32
  }
  func.func @transform_5(%arg0: i32) -> (i32, i32) {
    %c0_i32 = arith.constant 0 : i32
    %c0_i32_0 = arith.constant 0 : i32
    %c0_i32_1 = arith.constant 0 : i32
    return %c0_i32, %c0_i32_0 : i32, i32
  }
  func.func @transform_6(%arg0: i32) -> (i32, i32) {
    %c0_i32 = arith.constant 0 : i32
    %c0_i32_0 = arith.constant 0 : i32
    %c0_i32_1 = arith.constant 0 : i32
    return %c0_i32, %c0_i32_0 : i32, i32
  }
  func.func @transform_7(%arg0: i32) -> (i32, i32, i32) {
    %c0_i32 = arith.constant 0 : i32
    %c0_i32_0 = arith.constant 0 : i32
    %c0_i32_1 = arith.constant 0 : i32
    return %arg0, %c0_i32, %c0_i32_0 : i32, i32, i32
  }
}

</mosaic_0001>

<llo_original>
// kernel: anet_forward.1
$region0: #{anet_forward.1}
  #allocation0 [shape = 'u32[]', space=smem, size = 0x4, offset = 0x4, fixed_abs, tag = 'smem constant byte address 0x4 - core index']
  #allocation1 [shape = 'u32[144,128]{1,0:T(1,128)}', space=vmem, size = 0x12000, scoped, tag = 'internal scratch']
  #allocation2 [shape = 'f32[1,1]{1,0:T(1,128)S(6)}', space=smem, size = 0x200, scoped, tag = 'scoped memory for anet_forward.1']
  %s0 = inlined_call_operand.vmem [shape: f32[2,8], index: 0, kind: input, shape index: {}]
  %s1 = inlined_call_operand.hbm [shape: f32[8,128], index: 1, kind: input, shape index: {}]
  %s2 = inlined_call_operand.vmem [shape: f32[1,128], index: 2, kind: input, shape index: {}]
  %s3 = inlined_call_operand.hbm [shape: f32[128,128], index: 3, kind: input, shape index: {}]
  %s4 = inlined_call_operand.hbm [shape: f32[1,128], index: 4, kind: input, shape index: {}]
  %s5 = inlined_call_operand.vmem [shape: f32[8,128], index: 5, kind: input, shape index: {}]
  %s6 = inlined_call_operand.<no memory space> [shape: f32[1,1], index: 6, kind: input, shape index: {}]
  %s7 = inlined_call_operand.hbm [shape: f32[1,1,2], index: 7, kind: output, shape index: {}]
  %s8 = sld [smem:[#allocation0]]
  $region50: #{anet_forward.1} parent=0
    _
  %s10 = ssub.s32 1, %s8
  %s11 = scalar_select 0, %s10, %s8
  %12 = sst [smem:[#allocation2]] %s6
  $region1: #{anet_forward.1} parent=0
    #allocation3 [shape = 'u8[4096]{0}', space=vmem, size = 0x1000, scoped, tag = 'input window, operand 1, single buffered']
    #allocation4 [shape = 's32[1]{0}', space=sflag, size = 0x4, scoped, tag = 'scoped memory for anet_forward.1']
    #allocation5 [shape = 's32[1]{0}', space=sflag, size = 0x4, scoped, tag = 'scoped memory for anet_forward.1']
    #allocation6 [shape = 'u8[65536]{0}', space=vmem, size = 0x10000, scoped, tag = 'input window, operand 3, single buffered']
    #allocation7 [shape = 's32[1]{0}', space=sflag, size = 0x4, scoped, tag = 'scoped memory for anet_forward.1']
    #allocation8 [shape = 'u8[512]{0}', space=vmem, size = 0x400, scoped, tag = 'input window, operand 4, single buffered']
    #allocation9 [shape = 'u8[512]{0}', space=vmem, size = 0x400, scoped, tag = 'output window, operand 0, single buffered']
    %13 = vsyncpa [#allocation4], 0
    %14 = vsyncpa [#allocation7], 0
    %15 = vsyncpa [#allocation5], 0
    // Predicated region
    $region2: #{anet_forward.1} parent=1 // pred_check
      _
    $region3: #{anet_forward.1} parent=1 // pred_check_branch
      %17 = sbr.rel (0) target = $region5
    $region4: #{anet_forward.1} parent=1 // pred_region
      _
    $region5: #{anet_forward.1} parent=1 // pred_fallthru
      _
    // Predicated region
    $region6: #{anet_forward.1} parent=1 // pred_check
      _
    $region7: #{anet_forward.1} parent=1 // pred_check_branch
      %19 = sbr.rel (0) target = $region9
    $region8: #{anet_forward.1} parent=1 // pred_region
      %s21 = ssub.s32 128, 128
      %22 = vsyncadd [#allocation4], %s21
      %s24 = sshll.u32 [#allocation3], 4
      %s25 = int_to_ptr.vmem [resolvable:$true] %s24
      %27 = dma.hbm_to_vmem [thread:$0]  %s1, 128, %s25, [#allocation4]
    $region9: #{anet_forward.1} parent=1 // pred_fallthru
      _
    // Predicated region
    $region10: #{anet_forward.1} parent=1 // pred_check
      _
    $region11: #{anet_forward.1} parent=1 // pred_check_branch
      %29 = sbr.rel (0) target = $region13
    $region12: #{anet_forward.1} parent=1 // pred_region
      _
    $region13: #{anet_forward.1} parent=1 // pred_fallthru
      _
    // Predicated region
    $region14: #{anet_forward.1} parent=1 // pred_check
      _
    $region15: #{anet_forward.1} parent=1 // pred_check_branch
      %31 = sbr.rel (0) target = $region17
    $region16: #{anet_forward.1} parent=1 // pred_region
      %s33 = ssub.s32 2048, 2048
      %34 = vsyncadd [#allocation7], %s33
      %s35 = sshll.u32 [#allocation6], 4
      %s36 = int_to_ptr.vmem [resolvable:$true] %s35
      %41 = dma.hbm_to_vmem [thread:$0]  %s3, 2048, %s36, [#allocation7], 128, 128, 8
    $region17: #{anet_forward.1} parent=1 // pred_fallthru
      _
    // Predicated region
    $region18: #{anet_forward.1} parent=1 // pred_check
      _
    $region19: #{anet_forward.1} parent=1 // pred_check_branch
      %43 = sbr.rel (0) target = $region21
    $region20: #{anet_forward.1} parent=1 // pred_region
      %s45 = ssub.s32 16, 16
      %46 = vsyncadd [#allocation7], %s45
      %s48 = sshll.u32 [#allocation8], 4
      %s49 = int_to_ptr.vmem [resolvable:$true] %s48
      %51 = dma.hbm_to_vmem [thread:$0]  %s4, 16, %s49, [#allocation7]
    $region21: #{anet_forward.1} parent=1 // pred_fallthru
      _
    // Predicated region
    $region22: #{anet_forward.1} parent=1 // pred_check
      _
    $region23: #{anet_forward.1} parent=1 // pred_check_branch
      %53 = sbr.rel (0) target = $region25
    $region24: #{anet_forward.1} parent=1 // pred_region
      _
    $region25: #{anet_forward.1} parent=1 // pred_fallthru
      _
    // Predicated region
    $region26: #{anet_forward.1} parent=1 // pred_check
      _
    $region27: #{anet_forward.1} parent=1 // pred_check_branch
      %55 = sbr.rel (0) target = $region29
    $region28: #{anet_forward.1} parent=1 // pred_region
      _
    $region29: #{anet_forward.1} parent=1 // pred_fallthru
      _
    // Predicated region
    $region30: #{anet_forward.1} parent=1 // pred_check
      _
    $region31: #{anet_forward.1} parent=1 // pred_check_branch
      %57 = sbr.rel (0) target = $region33
    $region32: #{anet_forward.1} parent=1 // pred_region
      %58 = dma.done [#allocation4], 128
    $region33: #{anet_forward.1} parent=1 // pred_fallthru
      _
    // Predicated region
    $region34: #{anet_forward.1} parent=1 // pred_check
      _
    $region35: #{anet_forward.1} parent=1 // pred_check_branch
      %60 = sbr.rel (0) target = $region37
    $region36: #{anet_forward.1} parent=1 // pred_region
      %61 = dma.done [#allocation7], 2048
    $region37: #{anet_forward.1} parent=1 // pred_fallthru
      _
    // Predicated region
    $region38: #{anet_forward.1} parent=1 // pred_check
      _
    $region39: #{anet_forward.1} parent=1 // pred_check_branch
      %63 = sbr.rel (0) target = $region41
    $region40: #{anet_forward.1} parent=1 // pred_region
      %64 = dma.done [#allocation7], 16
    $region41: #{anet_forward.1} parent=1 // pred_fallthru
      _
    %v65 = vld [vmem:[%s0] sm:$0x3]
    %v66 = vld [vmem:[#allocation3] sm:$0xff]
    %v67 = vld [vmem:[%s2] sm:$0x1]
    %v69 = vlaneseq
    %v70 = vshrl.u32 %v69, 7
    %v71 = vsub.s32 0, %v70
    %v72 = vrot.slane %v67, %v71
    %vm74 = vcmask 64512
    %v76 = vsel %vm74, %v65, 0
    %78 = vmatprep.subr.mxu0 0.0
    %79 = vmatpush1.msra.mxu0 0.0
    %80 = vmatprep.subr.mxu0 0.0
    %81 = vmatpush1.msra.mxu0 0.0
    %82 = vmatprep.subr.mxu0 0.0
    %83 = vmatpush1.msra.mxu0 0.0
    %84 = vmatprep.subr.mxu0 0.0
    %85 = vmatpush1.msra.mxu0 0.0
    %86 = vmatprep.subr.mxu0 0.0
    %87 = vmatpush1.msra.mxu0 0.0
    %88 = vmatprep.subr.mxu0 0.0
    %89 = vmatpush1.msra.mxu0 0.0
    %90 = vmatprep.subr.mxu0 0.0
    %91 = vmatpush1.msra.mxu0 0.0
    %92 = vmatprep.subr.mxu0 0.0
    %93 = vmatpush1.msra.mxu0 0.0
    %94 = vmatprep.subr.mxu0 0.0
    %95 = vmatpush1.msra.mxu0 0.0
    %96 = vmatprep.subr.mxu0 0.0
    %97 = vmatpush1.msra.mxu0 0.0
    %98 = vmatprep.subr.mxu0 0.0
    %99 = vmatpush1.msra.mxu0 0.0
    %100 = vmatprep.subr.mxu0 0.0
    %101 = vmatpush1.msra.mxu0 0.0
    %102 = vmatprep.subr.mxu0 0.0
    %103 = vmatpush1.msra.mxu0 0.0
    %104 = vmatprep.subr.mxu0 0.0
    %105 = vmatpush1.msra.mxu0 0.0
    %106 = vmatprep.subr.mxu0 0.0
    %107 = vmatpush1.msra.mxu0 0.0
    %108 = vmatprep.subr.mxu0 0.0
    %109 = vmatpush1.msra.mxu0 %v66
    %110 = vmatprep.subr.mxu0 0.0
    %111 = vmatpush2.msra.mxu0 0.0
    %112 = vmatprep.subr.mxu0 0.0
    %113 = vmatpush2.msra.mxu0 0.0
    %114 = vmatprep.subr.mxu0 0.0
    %115 = vmatpush2.msra.mxu0 0.0
    %116 = vmatprep.subr.mxu0 0.0
    %117 = vmatpush2.msra.mxu0 0.0
    %118 = vmatprep.subr.mxu0 0.0
    %119 = vmatpush2.msra.mxu0 0.0
    %120 = vmatprep.subr.mxu0 0.0
    %121 = vmatpush2.msra.mxu0 0.0
    %122 = vmatprep.subr.mxu0 0.0
    %123 = vmatpush2.msra.mxu0 0.0
    %124 = vmatprep.subr.mxu0 0.0
    %125 = vmatpush2.msra.mxu0 0.0
    %126 = vmatprep.subr.mxu0 0.0
    %127 = vmatpush2.msra.mxu0 0.0
    %128 = vmatprep.subr.mxu0 0.0
    %129 = vmatpush2.msra.mxu0 0.0
    %130 = vmatprep.subr.mxu0 0.0
    %131 = vmatpush2.msra.mxu0 0.0
    %132 = vmatprep.subr.mxu0 0.0
    %133 = vmatpush2.msra.mxu0 0.0
    %134 = vmatprep.subr.mxu0 0.0
    %135 = vmatpush2.msra.mxu0 0.0
    %136 = vmatprep.subr.mxu0 0.0
    %137 = vmatpush2.msra.mxu0 0.0
    %138 = vmatprep.subr.mxu0 0.0
    %139 = vmatpush2.msra.mxu0 0.0
    %140 = vmatprep.subr.mxu0 0.0
    %141 = vmatpush2.msra.mxu0 0.0
    %142 = vmatprep.mubr.f32.mxu0 0.0
    %143 = vmatmul.mubr.f32.gmra.mxu0 %v76
    %v144 = vpop.f32.mrf.mxu0
    %v145 = vadd.f32 %v72, %v144
    %v146 = vpop.f32.mrf.mxu0
    %147 = vdwg.mxu0
    %v148 = vmax.f32 %v145, 0.0
    %v149 = vld [vmem:[#allocation6] sm:$0xff]
    %v150 = vld [vmem:[#allocation6 + $0x8] sm:$0xff]
    %v151 = vld [vmem:[#allocation6 + $0x10] sm:$0xff]
    %v152 = vld [vmem:[#allocation6 + $0x18] sm:$0xff]
    %v153 = vld [vmem:[#allocation6 + $0x20] sm:$0xff]
    %v154 = vld [vmem:[#allocation6 + $0x28] sm:$0xff]
    %v155 = vld [vmem:[#allocation6 + $0x30] sm:$0xff]
    %v156 = vld [vmem:[#allocation6 + $0x38] sm:$0xff]
    %v157 = vld [vmem:[#allocation6 + $0x40] sm:$0xff]
    %v158 = vld [vmem:[#allocation6 + $0x48] sm:$0xff]
    %v159 = vld [vmem:[#allocation6 + $0x50] sm:$0xff]
    %v160 = vld [vmem:[#allocation6 + $0x58] sm:$0xff]
    %v161 = vld [vmem:[#allocation6 + $0x60] sm:$0xff]
    %v162 = vld [vmem:[#allocation6 + $0x68] sm:$0xff]
    %v163 = vld [vmem:[#allocation6 + $0x70] sm:$0xff]
    %v164 = vld [vmem:[#allocation6 + $0x78] sm:$0xff]
    %v165 = vld [vmem:[#allocation8] sm:$0x1]
    %v167 = vlaneseq
    %v168 = vshrl.u32 %v167, 7
    %v169 = vsub.s32 0, %v168
    %v170 = vrot.slane %v165, %v169
    %172 = vmatprep.subr.mxu0 0.0
    %173 = vmatpush1.msra.mxu0 %v164
    %174 = vmatprep.subr.mxu0 0.0
    %175 = vmatpush1.msra.mxu0 %v163
    %176 = vmatprep.subr.mxu0 0.0
    %177 = vmatpush1.msra.mxu0 %v162
    %178 = vmatprep.subr.mxu0 0.0
    %179 = vmatpush1.msra.mxu0 %v161
    %180 = vmatprep.subr.mxu0 0.0
    %181 = vmatpush1.msra.mxu0 %v160
    %182 = vmatprep.subr.mxu0 0.0
    %183 = vmatpush1.msra.mxu0 %v159
    %184 = vmatprep.subr.mxu0 0.0
    %185 = vmatpush1.msra.mxu0 %v158
    %186 = vmatprep.subr.mxu0 0.0
    %187 = vmatpush1.msra.mxu0 %v157
    %188 = vmatprep.subr.mxu0 0.0
    %189 = vmatpush1.msra.mxu0 %v156
    %190 = vmatprep.subr.mxu0 0.0
    %191 = vmatpush1.msra.mxu0 %v155
    %192 = vmatprep.subr.mxu0 0.0
    %193 = vmatpush1.msra.mxu0 %v154
    %194 = vmatprep.subr.mxu0 0.0
    %195 = vmatpush1.msra.mxu0 %v153
    %196 = vmatprep.subr.mxu0 0.0
    %197 = vmatpush1.msra.mxu0 %v152
    %198 = vmatprep.subr.mxu0 0.0
    %199 = vmatpush1.msra.mxu0 %v151
    %200 = vmatprep.subr.mxu0 0.0
    %201 = vmatpush1.msra.mxu0 %v150
    %202 = vmatprep.subr.mxu0 0.0
    %203 = vmatpush1.msra.mxu0 %v149
    %204 = vmatprep.subr.mxu0 0.0
    %205 = vmatpush2.msra.mxu0 0.0
    %206 = vmatprep.subr.mxu0 0.0
    %207 = vmatpush2.msra.mxu0 0.0
    %208 = vmatprep.subr.mxu0 0.0
    %209 = vmatpush2.msra.mxu0 0.0
    %210 = vmatprep.subr.mxu0 0.0
    %211 = vmatpush2.msra.mxu0 0.0
    %212 = vmatprep.subr.mxu0 0.0
    %213 = vmatpush2.msra.mxu0 0.0
    %214 = vmatprep.subr.mxu0 0.0
    %215 = vmatpush2.msra.mxu0 0.0
    %216 = vmatprep.subr.mxu0 0.0
    %217 = vmatpush2.msra.mxu0 0.0
    %218 = vmatprep.subr.mxu0 0.0
    %219 = vmatpush2.msra.mxu0 0.0
    %220 = vmatprep.subr.mxu0 0.0
    %221 = vmatpush2.msra.mxu0 0.0
    %222 = vmatprep.subr.mxu0 0.0
    %223 = vmatpush2.msra.mxu0 0.0
    %224 = vmatprep.subr.mxu0 0.0
    %225 = vmatpush2.msra.mxu0 0.0
    %226 = vmatprep.subr.mxu0 0.0
    %227 = vmatpush2.msra.mxu0 0.0
    %228 = vmatprep.subr.mxu0 0.0
    %229 = vmatpush2.msra.mxu0 0.0
    %230 = vmatprep.subr.mxu0 0.0
    %231 = vmatpush2.msra.mxu0 0.0
    %232 = vmatprep.subr.mxu0 0.0
    %233 = vmatpush2.msra.mxu0 0.0
    %234 = vmatprep.subr.mxu0 0.0
    %235 = vmatpush2.msra.mxu0 0.0
    %236 = vmatprep.mubr.f32.mxu0 0.0
    %237 = vmatmul.mubr.f32.gmra.mxu0 %v148
    %v238 = vpop.f32.mrf.mxu0
    %v239 = vadd.f32 %v170, %v238
    %v240 = vpop.f32.mrf.mxu0
    %241 = vdwg.mxu0
    %v242 = vmax.f32 %v239, 0.0
    %v243 = vld [vmem:[%s5] sm:$0xff]
    %244 = vmatprep.subr.mxu0 0.0
    %245 = vmatpush1.xpose.msra.mxu0 0.0
    %246 = vmatprep.subr.mxu0 0.0
    %247 = vmatpush1.xpose.msra.mxu0 0.0
    %248 = vmatprep.subr.mxu0 0.0
    %249 = vmatpush1.xpose.msra.mxu0 0.0
    %250 = vmatprep.subr.mxu0 0.0
    %251 = vmatpush1.xpose.msra.mxu0 0.0
    %252 = vmatprep.subr.mxu0 0.0
    %253 = vmatpush1.xpose.msra.mxu0 0.0
    %254 = vmatprep.subr.mxu0 0.0
    %255 = vmatpush1.xpose.msra.mxu0 0.0
    %256 = vmatprep.subr.mxu0 0.0
    %257 = vmatpush1.xpose.msra.mxu0 0.0
    %258 = vmatprep.subr.mxu0 0.0
    %259 = vmatpush1.xpose.msra.mxu0 0.0
    %260 = vmatprep.subr.mxu0 0.0
    %261 = vmatpush1.xpose.msra.mxu0 0.0
    %262 = vmatprep.subr.mxu0 0.0
    %263 = vmatpush1.xpose.msra.mxu0 0.0
    %264 = vmatprep.subr.mxu0 0.0
    %265 = vmatpush1.xpose.msra.mxu0 0.0
    %266 = vmatprep.subr.mxu0 0.0
    %267 = vmatpush1.xpose.msra.mxu0 0.0
    %268 = vmatprep.subr.mxu0 0.0
    %269 = vmatpush1.xpose.msra.mxu0 0.0
    %270 = vmatprep.subr.mxu0 0.0
    %271 = vmatpush1.xpose.msra.mxu0 0.0
    %272 = vmatprep.subr.mxu0 0.0
    %273 = vmatpush1.xpose.msra.mxu0 0.0
    %274 = vmatprep.subr.mxu0 0.0
    %275 = vmatpush1.xpose.msra.mxu0 %v242
    %276 = vmatprep.subr.mxu0 0.0
    %277 = vmatpush2.xpose.msra.mxu0 0.0
    %278 = vmatprep.subr.mxu0 0.0
    %279 = vmatpush2.xpose.msra.mxu0 0.0
    %280 = vmatprep.subr.mxu0 0.0
    %281 = vmatpush2.xpose.msra.mxu0 0.0
    %282 = vmatprep.subr.mxu0 0.0
    %283 = vmatpush2.xpose.msra.mxu0 0.0
    %284 = vmatprep.subr.mxu0 0.0
    %285 = vmatpush2.xpose.msra.mxu0 0.0
    %286 = vmatprep.subr.mxu0 0.0
    %287 = vmatpush2.xpose.msra.mxu0 0.0
    %288 = vmatprep.subr.mxu0 0.0
    %289 = vmatpush2.xpose.msra.mxu0 0.0
    %290 = vmatprep.subr.mxu0 0.0
    %291 = vmatpush2.xpose.msra.mxu0 0.0
    %292 = vmatprep.subr.mxu0 0.0
    %293 = vmatpush2.xpose.msra.mxu0 0.0
    %294 = vmatprep.subr.mxu0 0.0
    %295 = vmatpush2.xpose.msra.mxu0 0.0
    %296 = vmatprep.subr.mxu0 0.0
    %297 = vmatpush2.xpose.msra.mxu0 0.0
    %298 = vmatprep.subr.mxu0 0.0
    %299 = vmatpush2.xpose.msra.mxu0 0.0
    %300 = vmatprep.subr.mxu0 0.0
    %301 = vmatpush2.xpose.msra.mxu0 0.0
    %302 = vmatprep.subr.mxu0 0.0
    %303 = vmatpush2.xpose.msra.mxu0 0.0
    %304 = vmatprep.subr.mxu0 0.0
    %305 = vmatpush2.xpose.msra.mxu0 0.0
    %306 = vmatprep.subr.mxu0 0.0
    %307 = vmatpush2.xpose.msra.mxu0 0.0
    %308 = vmatprep.mubr.f32.mxu0 0.0
    %309 = vmatmul.mubr.f32.gmra.mxu0 %v243
    %v310 = vpop.f32.mrf.mxu0
    %v311 = vadd.f32 0.0, %v310
    %v312 = vpop.f32.mrf.mxu0
    %313 = vdwg.mxu0
    %s314 = sld [smem:[#allocation2]]
    %v315 = vstv %s314
    %v316 = vadd.f32 %v311, %v315
    %v317 = vtanh.pop %v316
    %v318 = vmul.f32 %v317, 10.0
    %vm319 = vcmask 8192
    %320 = vst.msk [vmem:[#allocation9] sm:$0x1] %vm319, %v318
    // Predicated region
    $region42: #{anet_forward.1} parent=1 // pred_check
      _
    $region43: #{anet_forward.1} parent=1 // pred_check_branch
      %322 = sbr.rel (0) target = $region45
    $region44: #{anet_forward.1} parent=1 // pred_region
      %s324 = ssub.s32 16, 16
      %325 = vsyncadd [#allocation5], %s324
      %s327 = sshll.u32 [#allocation9], 4
      %s328 = int_to_ptr.vmem [resolvable:$true] %s327
      %330 = dma.vmem_to_hbm [thread:$0]  %s328, 16, %s7, [#allocation5]
    $region45: #{anet_forward.1} parent=1 // pred_fallthru
      _
    // Predicated region
    $region46: #{anet_forward.1} parent=1 // pred_check
      _
    $region47: #{anet_forward.1} parent=1 // pred_check_branch
      %332 = sbr.rel (0) target = $region49
    $region48: #{anet_forward.1} parent=1 // pred_region
      %333 = dma.done [#allocation5], 16
    $region49: #{anet_forward.1} parent=1 // pred_fallthru
      _
    %334 = vsyncpa [#allocation4], 1
    %335 = vsyncpa [#allocation7], 1
    %336 = vsyncpa [#allocation5], 1

</llo_original>
